<compile_context>
chip_gen: v6e
topology: v6e:2x2x1
jax: 0.10.0
libtpu: 0.0.40
codegen_flags: <defaults>
</compile_context>

<pallas_src>
import functools

import jax
import jax.numpy as jnp
from jax.experimental import pallas as pl
from jax.experimental.pallas import tpu as pltpu


_LANE = 128        # lane quantum (padding of the sample axis)
_TI = 128          # sublane tile for the i (row) axis of the pair matrix
_TJ_MAX = 512      # lane tile for the j (col) axis (shrunk to divide npad)
_PAD_TIME = 1e30   # padding sentinel: >= thresh, so padded samples fall out


def _interleave_block(i, n_blocks):
    """Bijection on [0, n_blocks): even steps -> low blocks, odd steps -> high
    blocks (reversed), so the triangular (sorted) workload balances across the
    two halves of the 'parallel' i axis (v7x megacore)."""
    half = i // 2
    odd = i % 2
    return half + odd * (n_blocks - 1 - 2 * half)


# -----------------------------------------------------------------------------
# Prologue: fused base MLP + pointwise SurvivalPointLoss partials.
# Grid = (npad // TI,); runs once over the sample axis.
# -----------------------------------------------------------------------------
def _mlp_point_kernel(scal_ref, x_ref, w1_ref, b1_ref, w2_ref,
                      t_ref, e_ref, v_ref, est_ref, pt_ref):
    b2 = scal_ref[0]
    h = jnp.dot(x_ref[...], w1_ref[...], preferred_element_type=jnp.float32)
    h = jnp.maximum(h + b1_ref[...], 0.0)                         # (TI, H)
    # (TI,H) @ (H,1) replaced by VPU multiply + lane reduce (H is tiny).
    est = jnp.sum(h * w2_ref[...], axis=1, keepdims=True) + b2    # (TI, 1)
    est_ref[...] = est

    t = t_ref[...]
    e = e_ref[...]
    v = v_ref[...]
    d = est - t
    pt = jnp.where(e > 0.5, d * d, jnp.square(jnp.maximum(-d, 0.0)))
    pt_ref[...] = jnp.where(v > 0.5, pt, 0.0)      # padding rows zeroed


# -----------------------------------------------------------------------------
# Pairwise soft C-index partials on the time-sorted sample axis.
# Grid = (n_i, n_j); i "parallel", j "arbitrary" (innermost).
# Outputs: lane-dense (1, 1, TJ) resident accumulators per i block.
# -----------------------------------------------------------------------------
def _pairwise_kernel(scal_ref, ei_ref, ej_ref, ti_ref, tj_ref, evi_ref,
                     num_ref, den_ref, *, ti_size, tj_size, n_i):
    gi = pl.program_id(0)
    j = pl.program_id(1)
    phys_i = _interleave_block(gi, n_i)

    @pl.when(j == 0)
    def _init():
        num_ref[...] = jnp.zeros_like(num_ref)
        den_ref[...] = jnp.zeros_like(den_ref)

    # Samples sorted ascending by event_time: if the whole row range sits at or
    # after the column range, there are no strict (t_i < t_j) pairs -> skip.
    active = phys_i * ti_size < (j + 1) * tj_size

    @pl.when(active)
    def _work():
        thresh = scal_ref[0]
        est_i = ei_ref[...]        # (TI, 1), pre-scaled by 0.5/sigma
        est_j = ej_ref[...]        # (1, TJ), pre-scaled by 0.5/sigma
        t_i = ti_ref[...]          # (TI, 1)
        t_j = tj_ref[...]          # (1, TJ)
        e_i = evi_ref[...]         # (TI, 1)

        mask_i = (e_i > 0.5) & (t_i < thresh)        # event_i & subset_i
        mask_j = t_j < thresh                        # subset_j (padding fails)
        pair = mask_i & (t_i < t_j) & mask_j         # (TI, TJ)

        # sigmoid(z) = 0.5 * (1 + tanh(z/2)); single EUP op, scale pre-folded.
        conc = 0.5 + 0.5 * jnp.tanh(est_j - est_i)   # (TI, TJ)

        s_num = jnp.sum(jnp.where(pair, conc, 0.0), axis=0, keepdims=True)
        s_den = jnp.sum(pair.astype(jnp.float32), axis=0, keepdims=True)
        num_ref[...] += s_num.reshape(1, 1, tj_size)
        den_ref[...] += s_den.reshape(1, 1, tj_size)


# -----------------------------------------------------------------------------
# Wrapper: padding, sort, the two pallas_calls, scalar epilogue.
# -----------------------------------------------------------------------------
def combined_loss_surv_model(x, event_time, event_indicator, params,
                             *, sigma=0.01, alpha=1.0):
    f32 = jnp.float32
    x = x.astype(f32)
    n, d = x.shape
    h = params["w1"].shape[1]

    npad = ((n + _LANE - 1) // _LANE) * _LANE
    ti = _TI
    tj = _TJ_MAX
    while npad % tj:
        tj //= 2
    n_i = npad // ti
    n_j = npad // tj

    t = event_time.astype(f32).reshape(-1)
    e = event_indicator.astype(f32).reshape(-1)

    x_pad = jnp.zeros((npad, d), f32).at[:n].set(x)
    t_pad = jnp.full((npad,), _PAD_TIME, f32).at[:n].set(t)
    e_pad = jnp.zeros((npad,), f32).at[:n].set(e)
    v_pad = jnp.zeros((npad,), f32).at[:n].set(1.0)

    w1 = params["w1"].astype(f32)                         # (D, H)
    b1 = params["b1"].astype(f32).reshape(1, h)
    w2 = params["w2"].astype(f32).reshape(1, h)
    b2 = params["b2"].astype(f32).reshape(1)

    smem = pltpu.MemorySpace.SMEM

    # ---- prologue: estimate + pointwise-loss partials (computed once) ------
    est_col, pt_col = pl.pallas_call(
        _mlp_point_kernel,
        grid=(n_i,),
        in_specs=[
            pl.BlockSpec(memory_space=smem),                  # [b2]
            pl.BlockSpec((ti, d), lambda i: (i, 0)),          # x rows
            pl.BlockSpec((d, h), lambda i: (0, 0)),           # w1
            pl.BlockSpec((1, h), lambda i: (0, 0)),           # b1
            pl.BlockSpec((1, h), lambda i: (0, 0)),           # w2 row
            pl.BlockSpec((ti, 1), lambda i: (i, 0)),          # t
            pl.BlockSpec((ti, 1), lambda i: (i, 0)),          # e
            pl.BlockSpec((ti, 1), lambda i: (i, 0)),          # valid
        ],
        out_specs=(
            pl.BlockSpec((ti, 1), lambda i: (i, 0)),          # estimate
            pl.BlockSpec((ti, 1), lambda i: (i, 0)),          # pointwise partial
        ),
        out_shape=(
            jax.ShapeDtypeStruct((npad, 1), f32),
            jax.ShapeDtypeStruct((npad, 1), f32),
        ),
        compiler_params=pltpu.CompilerParams(dimension_semantics=("parallel",)),
    )(b2, x_pad, w1, b1, w2,
      t_pad.reshape(npad, 1), e_pad.reshape(npad, 1), v_pad.reshape(npad, 1))

    estimate = est_col[:n, 0]                                 # model(x).view(-1)

    # Sort by event_time ascending (padding t=+BIG goes last) so the pairwise
    # grid can skip blocks strictly below the diagonal. num/den are
    # order-invariant so no unsort is needed.
    perm = jnp.argsort(t_pad)
    scale = 0.5 / float(sigma)                # tanh half + 1/sigma, folded once
    est_s = est_col[:, 0][perm] * scale
    t_s = t_pad[perm]
    e_s = e_pad[perm]

    # Global threshold (mask = event_time < max(event_time) - 2), computed once
    # on the real (unpadded) times and applied to both sides of every pair.
    thresh = (jnp.max(t) - 2.0).reshape(1)

    def _col_map(i, j):
        return (_interleave_block(i, n_i), 0)

    def _row_map(i, j):
        return (0, j)

    def _out_map(i, j):
        return (_interleave_block(i, n_i), 0, 0)

    cost = pl.CostEstimate(
        flops=int(10 * npad * npad),
        transcendentals=int(npad * npad),
        bytes_accessed=int(4 * (5 * npad + 2 * n_i * tj)),
    )

    num_part, den_part = pl.pallas_call(
        functools.partial(_pairwise_kernel, ti_size=ti, tj_size=tj, n_i=n_i),
        grid=(n_i, n_j),
        in_specs=[
            pl.BlockSpec(memory_space=smem),                  # [thresh]
            pl.BlockSpec((ti, 1), _col_map),                  # est_i (scaled)
            pl.BlockSpec((1, tj), _row_map),                  # est_j (scaled)
            pl.BlockSpec((ti, 1), _col_map),                  # t_i
            pl.BlockSpec((1, tj), _row_map),                  # t_j
            pl.BlockSpec((ti, 1), _col_map),                  # e_i
        ],
        out_specs=(
            pl.BlockSpec((1, 1, tj), _out_map),               # num partials
            pl.BlockSpec((1, 1, tj), _out_map),               # den partials
        ),
        out_shape=(
            jax.ShapeDtypeStruct((n_i, 1, tj), f32),
            jax.ShapeDtypeStruct((n_i, 1, tj), f32),
        ),
        compiler_params=pltpu.CompilerParams(
            dimension_semantics=("parallel", "arbitrary")),
        cost_estimate=cost,
    )(thresh, est_s.reshape(npad, 1), est_s.reshape(1, npad),
      t_s.reshape(npad, 1), t_s.reshape(1, npad), e_s.reshape(npad, 1))

    # Tiny scalar epilogue in plain XLA.
    num = jnp.sum(num_part)
    den = jnp.sum(den_part)
    soft_c = jnp.where(den > 0.0, num / jnp.maximum(den, 1e-30), 0.0)
    cindex = -1.0 * soft_c
    loss = jnp.sum(pt_col) / n
    total_loss = alpha * loss + (1.0 - alpha) * cindex
    return total_loss, estimate, cindex, loss


# -----------------------------------------------------------------------------
# Pure-JAX reference (same reconstructed loss bodies), parameter init, demo.
# -----------------------------------------------------------------------------
def _reference_forward(x, t, e, params, sigma, alpha):
    f32 = jnp.float32
    x = x.astype(f32)
    t = t.astype(f32)
    e = e.astype(f32)
    h = jnp.maximum(x @ params["w1"] + params["b1"].reshape(1, -1), 0.0)
    est = (h @ params["w2"].reshape(-1, 1)).reshape(-1) + params["b2"].reshape(())
    mask = t < jnp.max(t) - 2.0
    t_i, t_j = t[:, None], t[None, :]
    pair = (mask[:, None] & (e[:, None] > 0.5)) & (t_i < t_j) & mask[None, :]
    conc = jax.nn.sigmoid((est[None, :] - est[:, None]) / sigma)
    num = jnp.sum(jnp.where(pair, conc, 0.0))
    den = jnp.sum(pair.astype(f32))
    soft_c = jnp.where(den > 0.0, num / jnp.maximum(den, 1e-30), 0.0)
    cindex = -soft_c
    d = est - t
    pt = jnp.where(e > 0.5, d * d, jnp.square(jnp.maximum(-d, 0.0)))
    loss = jnp.sum(pt) / t.shape[0]
    total = alpha * loss + (1.0 - alpha) * cindex
    return total, est, cindex, loss


def init_params(key, d, h):
    k1, k2, k3, k4 = jax.random.split(key, 4)
    return {
        "w1": jax.random.normal(k1, (d, h), jnp.float32) * (1.0 / jnp.sqrt(d)),
        "b1": jax.random.normal(k2, (1, h), jnp.float32) * 0.01,
        "w2": jax.random.normal(k3, (h, 1), jnp.float32) * (1.0 / jnp.sqrt(h)),
        "b2": jax.random.normal(k4, (1, 1), jnp.float32) * 0.01,
    }


if __name__ == "__main__":
    N, D, H = 8, 16, 32
    SIGMA, ALPHA = 0.01, 0.5

    key = jax.random.PRNGKey(0)
    kx, kt, ke, kp = jax.random.split(key, 4)

    x = jax.random.normal(kx, (N, D), jnp.float32)
    event_time = jax.random.uniform(kt, (N,), jnp.float32, minval=0.0, maxval=10.0)
    event_indicator = (jax.random.uniform(ke, (N,)) < 0.6).astype(jnp.float32)

    params = init_params(kp, D, H)

    outs = combined_loss_surv_model(
        x, event_time, event_indicator, params, sigma=SIGMA, alpha=ALPHA)
    jax.block_until_ready(outs)

    refs = _reference_forward(x, event_time, event_indicator, params,
                              sigma=SIGMA, alpha=ALPHA)
    for got, want in zip(outs, refs):
        assert jnp.allclose(got, want, rtol=5e-3, atol=5e-3), (got, want)

    print("KERNEL_OK")
</pallas_src>

<mosaic_0001>
module attributes {stable_mosaic.version = 11 : i64} {
  func.func @_mlp_point_kernel(%arg0: i32, %arg1: memref<1xf32, #tpu.memory_space<smem>>, %arg2: memref<128x16xf32, #tpu.memory_space<vmem>>, %arg3: memref<16x32xf32, #tpu.memory_space<vmem>>, %arg4: memref<1x32xf32, #tpu.memory_space<vmem>>, %arg5: memref<1x32xf32, #tpu.memory_space<vmem>>, %arg6: memref<128x1xf32, #tpu.memory_space<vmem>>, %arg7: memref<128x1xf32, #tpu.memory_space<vmem>>, %arg8: memref<128x1xf32, #tpu.memory_space<vmem>>, %arg9: memref<128x1xf32, #tpu.memory_space<vmem>>, %arg10: memref<128x1xf32, #tpu.memory_space<vmem>>) attributes {dimension_semantics = [#tpu.dimension_semantics<parallel>], iteration_bounds = array<i64: 1>, scalar_prefetch = 0 : i64, scratch_operands = 0 : i64, tpu.core_type = #tpu.core_type<tc>, window_params = [{transform_indices = @transform_0, window_bounds = array<i64: 1>}, {transform_indices = @transform_1, window_bounds = array<i64: 128, 16>}, {pipeline_mode = #tpu.pipeline_mode<synchronous>, transform_indices = @transform_2, window_bounds = array<i64: 16, 32>}, {pipeline_mode = #tpu.pipeline_mode<synchronous>, transform_indices = @transform_3, window_bounds = array<i64: 1, 32>}, {pipeline_mode = #tpu.pipeline_mode<synchronous>, transform_indices = @transform_4, window_bounds = array<i64: 1, 32>}, {transform_indices = @transform_5, window_bounds = array<i64: 128, 1>}, {transform_indices = @transform_6, window_bounds = array<i64: 128, 1>}, {transform_indices = @transform_7, window_bounds = array<i64: 128, 1>}, {transform_indices = @transform_8, window_bounds = array<i64: 128, 1>}, {transform_indices = @transform_9, window_bounds = array<i64: 128, 1>}]} {
    %c0 = arith.constant 0 : index
    %0 = memref.load %arg1[%c0] : memref<1xf32, #tpu.memory_space<smem>>
    %c0_0 = arith.constant 0 : index
    %c0_1 = arith.constant 0 : index
    %1 = vector.load %arg2[%c0_0, %c0_1] : memref<128x16xf32, #tpu.memory_space<vmem>>, vector<128x16xf32>
    %c0_2 = arith.constant 0 : index
    %c0_3 = arith.constant 0 : index
    %2 = vector.load %arg3[%c0_2, %c0_3] : memref<16x32xf32, #tpu.memory_space<vmem>>, vector<16x32xf32>
    %cst = arith.constant dense<0.000000e+00> : vector<128x32xf32>
    %3 = tpu.matmul %1, %2, %cst {dimension_numbers = #tpu.dot_dimension_numbers<[1], [0], [0], [1], [0, 0, 1, 1], [], []>} : vector<128x16xf32>, vector<16x32xf32>, vector<128x32xf32> -> vector<128x32xf32>
    %c0_4 = arith.constant 0 : index
    %c0_5 = arith.constant 0 : index
    %4 = vector.load %arg4[%c0_4, %c0_5] : memref<1x32xf32, #tpu.memory_space<vmem>>, vector<1x32xf32>
    %5 = vector.broadcast %4 : vector<1x32xf32> to vector<128x32xf32>
    %6 = arith.addf %3, %5 : vector<128x32xf32>
    %cst_6 = arith.constant 0.000000e+00 : f32
    %7 = vector.broadcast %cst_6 : f32 to vector<128x32xf32>
    %8 = arith.maximumf %6, %7 : vector<128x32xf32>
    %c0_7 = arith.constant 0 : index
    %c0_8 = arith.constant 0 : index
    %9 = vector.load %arg5[%c0_7, %c0_8] : memref<1x32xf32, #tpu.memory_space<vmem>>, vector<1x32xf32>
    %10 = vector.broadcast %9 : vector<1x32xf32> to vector<128x32xf32>
    %11 = arith.mulf %8, %10 : vector<128x32xf32>
    %cst_9 = arith.constant dense<0.000000e+00> : vector<128xf32>
    %12 = vector.multi_reduction <add>, %11, %cst_9 [1] : vector<128x32xf32> to vector<128xf32>
    %13 = vector.shape_cast %12 : vector<128xf32> to vector<128x1xf32>
    %14 = vector.broadcast %0 : f32 to vector<128x1xf32>
    %15 = arith.addf %13, %14 : vector<128x1xf32>
    %c0_10 = arith.constant 0 : index
    %c0_11 = arith.constant 0 : index
    %16 = vector.load %arg9[%c0_10, %c0_11] : memref<128x1xf32, #tpu.memory_space<vmem>>, vector<128x1xf32>
    tpu.vector_store %arg9[%c0_10, %c0_11], %15 {strides = array<i32>} : memref<128x1xf32, #tpu.memory_space<vmem>>, vector<128x1xf32>,
    %c0_12 = arith.constant 0 : index
    %c0_13 = arith.constant 0 : index
    %17 = vector.load %arg6[%c0_12, %c0_13] : memref<128x1xf32, #tpu.memory_space<vmem>>, vector<128x1xf32>
    %c0_14 = arith.constant 0 : index
    %c0_15 = arith.constant 0 : index
    %18 = vector.load %arg7[%c0_14, %c0_15] : memref<128x1xf32, #tpu.memory_space<vmem>>, vector<128x1xf32>
    %c0_16 = arith.constant 0 : index
    %c0_17 = arith.constant 0 : index
    %19 = vector.load %arg8[%c0_16, %c0_17] : memref<128x1xf32, #tpu.memory_space<vmem>>, vector<128x1xf32>
    %20 = arith.subf %15, %17 : vector<128x1xf32>
    %cst_18 = arith.constant 5.000000e-01 : f32
    %21 = vector.broadcast %cst_18 : f32 to vector<128x1xf32>
    %22 = arith.cmpf ogt, %18, %21 : vector<128x1xf32>
    %23 = arith.mulf %20, %20 : vector<128x1xf32>
    %cst_19 = arith.constant 0.000000e+00 : f32
    %24 = vector.broadcast %cst_19 : f32 to vector<128x1xf32>
    %25 = arith.subf %24, %20 : vector<128x1xf32>
    %cst_20 = arith.constant 0.000000e+00 : f32
    %26 = vector.broadcast %cst_20 : f32 to vector<128x1xf32>
    %27 = arith.maximumf %25, %26 : vector<128x1xf32>
    %28 = arith.mulf %27, %27 : vector<128x1xf32>
    %29 = arith.select %22, %23, %28 : vector<128x1xi1>, vector<128x1xf32>
    %cst_21 = arith.constant 5.000000e-01 : f32
    %30 = vector.broadcast %cst_21 : f32 to vector<128x1xf32>
    %31 = arith.cmpf ogt, %19, %30 : vector<128x1xf32>
    %cst_22 = arith.constant 0.000000e+00 : f32
    %32 = vector.broadcast %cst_22 : f32 to vector<128x1xf32>
    %33 = arith.select %31, %29, %32 : vector<128x1xi1>, vector<128x1xf32>
    %c0_23 = arith.constant 0 : index
    %c0_24 = arith.constant 0 : index
    %34 = vector.load %arg10[%c0_23, %c0_24] : memref<128x1xf32, #tpu.memory_space<vmem>>, vector<128x1xf32>
    tpu.vector_store %arg10[%c0_23, %c0_24], %33 {strides = array<i32>} : memref<128x1xf32, #tpu.memory_space<vmem>>, vector<128x1xf32>,
    return
  }
  func.func @transform_0(%arg0: i32) -> i32 {
    %c0_i32 = arith.constant 0 : i32
    %c0_i32_0 = arith.constant 0 : i32
    return %c0_i32 : i32
  }
  func.func @transform_1(%arg0: i32) -> (i32, i32) {
    %c0_i32 = arith.constant 0 : i32
    %c0_i32_0 = arith.constant 0 : i32
    return %arg0, %c0_i32 : i32, i32
  }
  func.func @transform_2(%arg0: i32) -> (i32, i32) {
    %c0_i32 = arith.constant 0 : i32
    %c0_i32_0 = arith.constant 0 : i32
    %c0_i32_1 = arith.constant 0 : i32
    return %c0_i32, %c0_i32_0 : i32, i32
  }
  func.func @transform_3(%arg0: i32) -> (i32, i32) {
    %c0_i32 = arith.constant 0 : i32
    %c0_i32_0 = arith.constant 0 : i32
    %c0_i32_1 = arith.constant 0 : i32
    return %c0_i32, %c0_i32_0 : i32, i32
  }
  func.func @transform_4(%arg0: i32) -> (i32, i32) {
    %c0_i32 = arith.constant 0 : i32
    %c0_i32_0 = arith.constant 0 : i32
    %c0_i32_1 = arith.constant 0 : i32
    return %c0_i32, %c0_i32_0 : i32, i32
  }
  func.func @transform_5(%arg0: i32) -> (i32, i32) {
    %c0_i32 = arith.constant 0 : i32
    %c0_i32_0 = arith.constant 0 : i32
    return %arg0, %c0_i32 : i32, i32
  }
  func.func @transform_6(%arg0: i32) -> (i32, i32) {
    %c0_i32 = arith.constant 0 : i32
    %c0_i32_0 = arith.constant 0 : i32
    return %arg0, %c0_i32 : i32, i32
  }
  func.func @transform_7(%arg0: i32) -> (i32, i32) {
    %c0_i32 = arith.constant 0 : i32
    %c0_i32_0 = arith.constant 0 : i32
    return %arg0, %c0_i32 : i32, i32
  }
  func.func @transform_8(%arg0: i32) -> (i32, i32) {
    %c0_i32 = arith.constant 0 : i32
    %c0_i32_0 = arith.constant 0 : i32
    return %arg0, %c0_i32 : i32, i32
  }
  func.func @transform_9(%arg0: i32) -> (i32, i32) {
    %c0_i32 = arith.constant 0 : i32
    %c0_i32_0 = arith.constant 0 : i32
    return %arg0, %c0_i32 : i32, i32
  }
}

</mosaic_0001>

<llo_original>
// kernel: tpu_custom_call.1
$region0: #{tpu_custom_call.1}
  #allocation0 [shape = 'u32[]', space=smem, size = 0x4, offset = 0x4, fixed_abs, tag = 'smem constant byte address 0x4 - core index']
  #allocation1 [shape = 'u32[144,128]{1,0:T(1,128)}', space=vmem, size = 0x12000, scoped, tag = 'internal scratch']
  #allocation2 [shape = 'f32[1]{0:T(128)S(6)}', space=smem, size = 0x200, scoped, tag = 'scoped memory for tpu_custom_call.1']
  %s0 = inlined_call_operand.<no memory space> [shape: f32[1], index: 0, kind: input, shape index: {}]
  %s1 = inlined_call_operand.vmem [shape: f32[128,16], index: 1, kind: input, shape index: {}]
  %s2 = inlined_call_operand.vmem [shape: f32[16,32], index: 2, kind: input, shape index: {}]
  %s3 = inlined_call_operand.vmem [shape: f32[1,32], index: 3, kind: input, shape index: {}]
  %s4 = inlined_call_operand.vmem [shape: f32[1,32], index: 4, kind: input, shape index: {}]
  %s5 = inlined_call_operand.vmem [shape: f32[128,1], index: 5, kind: input, shape index: {}]
  %s6 = inlined_call_operand.vmem [shape: f32[128,1], index: 6, kind: input, shape index: {}]
  %s7 = inlined_call_operand.vmem [shape: f32[128,1], index: 7, kind: input, shape index: {}]
  %s8 = inlined_call_operand.vmem [shape: f32[128,1], index: 8, kind: output, shape index: {0}]
  %s9 = inlined_call_operand.vmem [shape: f32[128,1], index: 9, kind: output, shape index: {1}]
  %10 = xla_tuple %s8, %s9
  %s11 = sld [smem:[#allocation0]]
  $region50: #{tpu_custom_call.1} parent=0
    _
  %s13 = ssub.s32 1, %s11
  %s14 = scalar_select 0, %s13, %s11
  %15 = sst [smem:[#allocation2]] %s0
  // Predicated region
  $region2: #{tpu_custom_call.1} parent=0 // pred_check
    _
  $region3: #{tpu_custom_call.1} parent=0 // pred_check_branch
    %17 = sbr.rel (0) target = $region5
  $region4: #{tpu_custom_call.1} parent=0 // pred_region
    _
  $region5: #{tpu_custom_call.1} parent=0 // pred_fallthru
    _
  // Predicated region
  $region6: #{tpu_custom_call.1} parent=0 // pred_check
    _
  $region7: #{tpu_custom_call.1} parent=0 // pred_check_branch
    %19 = sbr.rel (0) target = $region9
  $region8: #{tpu_custom_call.1} parent=0 // pred_region
    _
  $region9: #{tpu_custom_call.1} parent=0 // pred_fallthru
    _
  // Predicated region
  $region10: #{tpu_custom_call.1} parent=0 // pred_check
    _
  $region11: #{tpu_custom_call.1} parent=0 // pred_check_branch
    %21 = sbr.rel (0) target = $region13
  $region12: #{tpu_custom_call.1} parent=0 // pred_region
    _
  $region13: #{tpu_custom_call.1} parent=0 // pred_fallthru
    _
  // Predicated region
  $region14: #{tpu_custom_call.1} parent=0 // pred_check
    _
  $region15: #{tpu_custom_call.1} parent=0 // pred_check_branch
    %23 = sbr.rel (0) target = $region17
  $region16: #{tpu_custom_call.1} parent=0 // pred_region
    _
  $region17: #{tpu_custom_call.1} parent=0 // pred_fallthru
    _
  // Predicated region
  $region18: #{tpu_custom_call.1} parent=0 // pred_check
    _
  $region19: #{tpu_custom_call.1} parent=0 // pred_check_branch
    %25 = sbr.rel (0) target = $region21
  $region20: #{tpu_custom_call.1} parent=0 // pred_region
    _
  $region21: #{tpu_custom_call.1} parent=0 // pred_fallthru
    _
  // Predicated region
  $region22: #{tpu_custom_call.1} parent=0 // pred_check
    _
  $region23: #{tpu_custom_call.1} parent=0 // pred_check_branch
    %27 = sbr.rel (0) target = $region25
  $region24: #{tpu_custom_call.1} parent=0 // pred_region
    _
  $region25: #{tpu_custom_call.1} parent=0 // pred_fallthru
    _
  // Predicated region
  $region26: #{tpu_custom_call.1} parent=0 // pred_check
    _
  $region27: #{tpu_custom_call.1} parent=0 // pred_check_branch
    %29 = sbr.rel (0) target = $region29
  $region28: #{tpu_custom_call.1} parent=0 // pred_region
    _
  $region29: #{tpu_custom_call.1} parent=0 // pred_fallthru
    _
  // Predicated region
  $region30: #{tpu_custom_call.1} parent=0 // pred_check
    _
  $region31: #{tpu_custom_call.1} parent=0 // pred_check_branch
    %31 = sbr.rel (0) target = $region33
  $region32: #{tpu_custom_call.1} parent=0 // pred_region
    _
  $region33: #{tpu_custom_call.1} parent=0 // pred_fallthru
    _
  %s32 = sld [smem:[#allocation2]]
  %v33 = vld [vmem:[%s1] sm:$0xff]
  %v34 = vld [vmem:[%s1 + $0x8] sm:$0xff]
  %v35 = vld [vmem:[%s1 + $0x10] sm:$0xff]
  %v36 = vld [vmem:[%s1 + $0x18] sm:$0xff]
  %v37 = vld [vmem:[%s1 + $0x20] sm:$0xff]
  %v38 = vld [vmem:[%s1 + $0x28] sm:$0xff]
  %v39 = vld [vmem:[%s1 + $0x30] sm:$0xff]
  %v40 = vld [vmem:[%s1 + $0x38] sm:$0xff]
  %v41 = vld [vmem:[%s1 + $0x40] sm:$0xff]
  %v42 = vld [vmem:[%s1 + $0x48] sm:$0xff]
  %v43 = vld [vmem:[%s1 + $0x50] sm:$0xff]
  %v44 = vld [vmem:[%s1 + $0x58] sm:$0xff]
  %v45 = vld [vmem:[%s1 + $0x60] sm:$0xff]
  %v46 = vld [vmem:[%s1 + $0x68] sm:$0xff]
  %v47 = vld [vmem:[%s1 + $0x70] sm:$0xff]
  %v48 = vld [vmem:[%s1 + $0x78] sm:$0xff]
  %v49 = vld [vmem:[%s2] sm:$0xff]
  %v50 = vld [vmem:[%s2 + $0x8] sm:$0xff]
  %v51 = vld [vmem:[%s3] sm:$0x1]
  %v53 = vlaneseq
  %v54 = vshrl.u32 %v53, 7
  %v55 = vsub.s32 0, %v54
  %v56 = vrot.slane %v51, %v55
  %vm58 = vcmask 130048
  %v60 = vsel %vm58, %v33, 0
  %v63 = vsel %vm58, %v34, 0
  %v66 = vsel %vm58, %v35, 0
  %v69 = vsel %vm58, %v36, 0
  %v72 = vsel %vm58, %v37, 0
  %v75 = vsel %vm58, %v38, 0
  %v78 = vsel %vm58, %v39, 0
  %v81 = vsel %vm58, %v40, 0
  %v84 = vsel %vm58, %v41, 0
  %v87 = vsel %vm58, %v42, 0
  %v90 = vsel %vm58, %v43, 0
  %v93 = vsel %vm58, %v44, 0
  %v96 = vsel %vm58, %v45, 0
  %v99 = vsel %vm58, %v46, 0
  %v102 = vsel %vm58, %v47, 0
  %v105 = vsel %vm58, %v48, 0
  %107 = vmatprep.subr.mxu0 0.0
  %108 = vmatpush1.msra.mxu0 0.0
  %109 = vmatprep.subr.mxu0 0.0
  %110 = vmatpush1.msra.mxu0 0.0
  %111 = vmatprep.subr.mxu0 0.0
  %112 = vmatpush1.msra.mxu0 0.0
  %113 = vmatprep.subr.mxu0 0.0
  %114 = vmatpush1.msra.mxu0 0.0
  %115 = vmatprep.subr.mxu0 0.0
  %116 = vmatpush1.msra.mxu0 0.0
  %117 = vmatprep.subr.mxu0 0.0
  %118 = vmatpush1.msra.mxu0 0.0
  %119 = vmatprep.subr.mxu0 0.0
  %120 = vmatpush1.msra.mxu0 0.0
  %121 = vmatprep.subr.mxu0 0.0
  %122 = vmatpush1.msra.mxu0 0.0
  %123 = vmatprep.subr.mxu0 0.0
  %124 = vmatpush1.msra.mxu0 0.0
  %125 = vmatprep.subr.mxu0 0.0
  %126 = vmatpush1.msra.mxu0 0.0
  %127 = vmatprep.subr.mxu0 0.0
  %128 = vmatpush1.msra.mxu0 0.0
  %129 = vmatprep.subr.mxu0 0.0
  %130 = vmatpush1.msra.mxu0 0.0
  %131 = vmatprep.subr.mxu0 0.0
  %132 = vmatpush1.msra.mxu0 0.0
  %133 = vmatprep.subr.mxu0 0.0
  %134 = vmatpush1.msra.mxu0 0.0
  %135 = vmatprep.subr.mxu0 0.0
  %136 = vmatpush1.msra.mxu0 %v50
  %137 = vmatprep.subr.mxu0 0.0
  %138 = vmatpush1.msra.mxu0 %v49
  %139 = vmatprep.subr.mxu0 0.0
  %140 = vmatpush2.msra.mxu0 0.0
  %141 = vmatprep.subr.mxu0 0.0
  %142 = vmatpush2.msra.mxu0 0.0
  %143 = vmatprep.subr.mxu0 0.0
  %144 = vmatpush2.msra.mxu0 0.0
  %145 = vmatprep.subr.mxu0 0.0
  %146 = vmatpush2.msra.mxu0 0.0
  %147 = vmatprep.subr.mxu0 0.0
  %148 = vmatpush2.msra.mxu0 0.0
  %149 = vmatprep.subr.mxu0 0.0
  %150 = vmatpush2.msra.mxu0 0.0
  %151 = vmatprep.subr.mxu0 0.0
  %152 = vmatpush2.msra.mxu0 0.0
  %153 = vmatprep.subr.mxu0 0.0
  %154 = vmatpush2.msra.mxu0 0.0
  %155 = vmatprep.subr.mxu0 0.0
  %156 = vmatpush2.msra.mxu0 0.0
  %157 = vmatprep.subr.mxu0 0.0
  %158 = vmatpush2.msra.mxu0 0.0
  %159 = vmatprep.subr.mxu0 0.0
  %160 = vmatpush2.msra.mxu0 0.0
  %161 = vmatprep.subr.mxu0 0.0
  %162 = vmatpush2.msra.mxu0 0.0
  %163 = vmatprep.subr.mxu0 0.0
  %164 = vmatpush2.msra.mxu0 0.0
  %165 = vmatprep.subr.mxu0 0.0
  %166 = vmatpush2.msra.mxu0 0.0
  %167 = vmatprep.subr.mxu0 0.0
  %168 = vmatpush2.msra.mxu0 0.0
  %169 = vmatprep.subr.mxu0 0.0
  %170 = vmatpush2.msra.mxu0 0.0
  %171 = vmatprep.mubr.f32.mxu0 0.0
  %172 = vmatmul.mubr.f32.gmra.mxu0 %v60
  %v173 = vpop.f32.mrf.mxu0
  %v174 = vadd.f32 %v56, %v173
  %v175 = vpop.f32.mrf.mxu0
  %176 = vmatprep.mubr.f32.mxu0 0.0
  %177 = vmatmul.mubr.f32.gmra.mxu0 %v63
  %v178 = vpop.f32.mrf.mxu0
  %v179 = vadd.f32 %v56, %v178
  %v180 = vpop.f32.mrf.mxu0
  %181 = vmatprep.mubr.f32.mxu0 0.0
  %182 = vmatmul.mubr.f32.gmra.mxu0 %v66
  %v183 = vpop.f32.mrf.mxu0
  %v184 = vadd.f32 %v56, %v183
  %v185 = vpop.f32.mrf.mxu0
  %186 = vmatprep.mubr.f32.mxu0 0.0
  %187 = vmatmul.mubr.f32.gmra.mxu0 %v69
  %v188 = vpop.f32.mrf.mxu0
  %v189 = vadd.f32 %v56, %v188
  %v190 = vpop.f32.mrf.mxu0
  %191 = vmatprep.mubr.f32.mxu0 0.0
  %192 = vmatmul.mubr.f32.gmra.mxu0 %v72
  %v193 = vpop.f32.mrf.mxu0
  %v194 = vadd.f32 %v56, %v193
  %v195 = vpop.f32.mrf.mxu0
  %196 = vmatprep.mubr.f32.mxu0 0.0
  %197 = vmatmul.mubr.f32.gmra.mxu0 %v75
  %v198 = vpop.f32.mrf.mxu0
  %v199 = vadd.f32 %v56, %v198
  %v200 = vpop.f32.mrf.mxu0
  %201 = vmatprep.mubr.f32.mxu0 0.0
  %202 = vmatmul.mubr.f32.gmra.mxu0 %v78
  %v203 = vpop.f32.mrf.mxu0
  %v204 = vadd.f32 %v56, %v203
  %v205 = vpop.f32.mrf.mxu0
  %206 = vmatprep.mubr.f32.mxu0 0.0
  %207 = vmatmul.mubr.f32.gmra.mxu0 %v81
  %v208 = vpop.f32.mrf.mxu0
  %v209 = vadd.f32 %v56, %v208
  %v210 = vpop.f32.mrf.mxu0
  %211 = vmatprep.mubr.f32.mxu0 0.0
  %212 = vmatmul.mubr.f32.gmra.mxu0 %v84
  %v213 = vpop.f32.mrf.mxu0
  %v214 = vadd.f32 %v56, %v213
  %v215 = vpop.f32.mrf.mxu0
  %216 = vmatprep.mubr.f32.mxu0 0.0
  %217 = vmatmul.mubr.f32.gmra.mxu0 %v87
  %v218 = vpop.f32.mrf.mxu0
  %v219 = vadd.f32 %v56, %v218
  %v220 = vpop.f32.mrf.mxu0
  %221 = vmatprep.mubr.f32.mxu0 0.0
  %222 = vmatmul.mubr.f32.gmra.mxu0 %v90
  %v223 = vpop.f32.mrf.mxu0
  %v224 = vadd.f32 %v56, %v223
  %v225 = vpop.f32.mrf.mxu0
  %226 = vmatprep.mubr.f32.mxu0 0.0
  %227 = vmatmul.mubr.f32.gmra.mxu0 %v93
  %v228 = vpop.f32.mrf.mxu0
  %v229 = vadd.f32 %v56, %v228
  %v230 = vpop.f32.mrf.mxu0
  %231 = vmatprep.mubr.f32.mxu0 0.0
  %232 = vmatmul.mubr.f32.gmra.mxu0 %v96
  %v233 = vpop.f32.mrf.mxu0
  %v234 = vadd.f32 %v56, %v233
  %v235 = vpop.f32.mrf.mxu0
  %236 = vmatprep.mubr.f32.mxu0 0.0
  %237 = vmatmul.mubr.f32.gmra.mxu0 %v99
  %v238 = vpop.f32.mrf.mxu0
  %v239 = vadd.f32 %v56, %v238
  %v240 = vpop.f32.mrf.mxu0
  %241 = vmatprep.mubr.f32.mxu0 0.0
  %242 = vmatmul.mubr.f32.gmra.mxu0 %v102
  %v243 = vpop.f32.mrf.mxu0
  %v244 = vadd.f32 %v56, %v243
  %v245 = vpop.f32.mrf.mxu0
  %246 = vmatprep.mubr.f32.mxu0 0.0
  %247 = vmatmul.mubr.f32.gmra.mxu0 %v105
  %v248 = vpop.f32.mrf.mxu0
  %v249 = vadd.f32 %v56, %v248
  %v250 = vpop.f32.mrf.mxu0
  %251 = vdwg.mxu0
  %v252 = vmax.f32 %v174, 0.0
  %v253 = vmax.f32 %v179, 0.0
  %v254 = vmax.f32 %v184, 0.0
  %v255 = vmax.f32 %v189, 0.0
  %v256 = vmax.f32 %v194, 0.0
  %v257 = vmax.f32 %v199, 0.0
  %v258 = vmax.f32 %v204, 0.0
  %v259 = vmax.f32 %v209, 0.0
  %v260 = vmax.f32 %v214, 0.0
  %v261 = vmax.f32 %v219, 0.0
  %v262 = vmax.f32 %v224, 0.0
  %v263 = vmax.f32 %v229, 0.0
  %v264 = vmax.f32 %v234, 0.0
  %v265 = vmax.f32 %v239, 0.0
  %v266 = vmax.f32 %v244, 0.0
  %v267 = vmax.f32 %v249, 0.0
  %v268 = vld [vmem:[%s4] sm:$0x1]
  %v270 = vlaneseq
  %v271 = vshrl.u32 %v270, 7
  %v272 = vsub.s32 0, %v271
  %v273 = vrot.slane %v268, %v272
  %v275 = vmul.f32 %v252, %v273
  %v276 = vmul.f32 %v253, %v273
  %v277 = vmul.f32 %v254, %v273
  %v278 = vmul.f32 %v255, %v273
  %v279 = vmul.f32 %v256, %v273
  %v280 = vmul.f32 %v257, %v273
  %v281 = vmul.f32 %v258, %v273
  %v282 = vmul.f32 %v259, %v273
  %v283 = vmul.f32 %v260, %v273
  %v284 = vmul.f32 %v261, %v273
  %v285 = vmul.f32 %v262, %v273
  %v286 = vmul.f32 %v263, %v273
  %v287 = vmul.f32 %v264, %v273
  %v288 = vmul.f32 %v265, %v273
  %v289 = vmul.f32 %v266, %v273
  %v290 = vmul.f32 %v267, %v273
  %vm291 = vcmask 261120
  %v292 = vsel %vm291, %v275, 0.0
  %293 = vadd.xlane.f32.xlu0 %v292
  %v294 = vpop.xlane.xlu0 %293
  %v295 = vsel %vm291, %v276, 0.0
  %296 = vadd.xlane.f32.xlu0 %v295
  %v297 = vpop.xlane.xlu0 %296
  %v298 = vsel %vm291, %v277, 0.0
  %299 = vadd.xlane.f32.xlu0 %v298
  %v300 = vpop.xlane.xlu0 %299
  %v301 = vsel %vm291, %v278, 0.0
  %302 = vadd.xlane.f32.xlu0 %v301
  %v303 = vpop.xlane.xlu0 %302
  %v304 = vsel %vm291, %v279, 0.0
  %305 = vadd.xlane.f32.xlu0 %v304
  %v306 = vpop.xlane.xlu0 %305
  %v307 = vsel %vm291, %v280, 0.0
  %308 = vadd.xlane.f32.xlu0 %v307
  %v309 = vpop.xlane.xlu0 %308
  %v310 = vsel %vm291, %v281, 0.0
  %311 = vadd.xlane.f32.xlu0 %v310
  %v312 = vpop.xlane.xlu0 %311
  %v313 = vsel %vm291, %v282, 0.0
  %314 = vadd.xlane.f32.xlu0 %v313
  %v315 = vpop.xlane.xlu0 %314
  %v316 = vsel %vm291, %v283, 0.0
  %317 = vadd.xlane.f32.xlu0 %v316
  %v318 = vpop.xlane.xlu0 %317
  %v319 = vsel %vm291, %v284, 0.0
  %320 = vadd.xlane.f32.xlu0 %v319
  %v321 = vpop.xlane.xlu0 %320
  %v322 = vsel %vm291, %v285, 0.0
  %323 = vadd.xlane.f32.xlu0 %v322
  %v324 = vpop.xlane.xlu0 %323
  %v325 = vsel %vm291, %v286, 0.0
  %326 = vadd.xlane.f32.xlu0 %v325
  %v327 = vpop.xlane.xlu0 %326
  %v328 = vsel %vm291, %v287, 0.0
  %329 = vadd.xlane.f32.xlu0 %v328
  %v330 = vpop.xlane.xlu0 %329
  %v331 = vsel %vm291, %v288, 0.0
  %332 = vadd.xlane.f32.xlu0 %v331
  %v333 = vpop.xlane.xlu0 %332
  %v334 = vsel %vm291, %v289, 0.0
  %335 = vadd.xlane.f32.xlu0 %v334
  %v336 = vpop.xlane.xlu0 %335
  %v337 = vsel %vm291, %v290, 0.0
  %338 = vadd.xlane.f32.xlu0 %v337
  %v339 = vpop.xlane.xlu0 %338
  %v340 = vstv %s32
  %v341 = vadd.f32 %v294, %v340
  %v342 = vadd.f32 %v297, %v340
  %v343 = vadd.f32 %v300, %v340
  %v344 = vadd.f32 %v303, %v340
  %v345 = vadd.f32 %v306, %v340
  %v346 = vadd.f32 %v309, %v340
  %v347 = vadd.f32 %v312, %v340
  %v348 = vadd.f32 %v315, %v340
  %v349 = vadd.f32 %v318, %v340
  %v350 = vadd.f32 %v321, %v340
  %v351 = vadd.f32 %v324, %v340
  %v352 = vadd.f32 %v327, %v340
  %v353 = vadd.f32 %v330, %v340
  %v354 = vadd.f32 %v333, %v340
  %v355 = vadd.f32 %v336, %v340
  %v356 = vadd.f32 %v339, %v340
  %vm357 = vcmask 7168
  %358 = vst.msk [vmem:[%s8] sm:$0xff] %vm357, %v341
  %359 = vst.msk [vmem:[%s8 + $0x8] sm:$0xff] %vm357, %v342
  %360 = vst.msk [vmem:[%s8 + $0x10] sm:$0xff] %vm357, %v343
  %361 = vst.msk [vmem:[%s8 + $0x18] sm:$0xff] %vm357, %v344
  %362 = vst.msk [vmem:[%s8 + $0x20] sm:$0xff] %vm357, %v345
  %363 = vst.msk [vmem:[%s8 + $0x28] sm:$0xff] %vm357, %v346
  %364 = vst.msk [vmem:[%s8 + $0x30] sm:$0xff] %vm357, %v347
  %365 = vst.msk [vmem:[%s8 + $0x38] sm:$0xff] %vm357, %v348
  %366 = vst.msk [vmem:[%s8 + $0x40] sm:$0xff] %vm357, %v349
  %367 = vst.msk [vmem:[%s8 + $0x48] sm:$0xff] %vm357, %v350
  %368 = vst.msk [vmem:[%s8 + $0x50] sm:$0xff] %vm357, %v351
  %369 = vst.msk [vmem:[%s8 + $0x58] sm:$0xff] %vm357, %v352
  %370 = vst.msk [vmem:[%s8 + $0x60] sm:$0xff] %vm357, %v353
  %371 = vst.msk [vmem:[%s8 + $0x68] sm:$0xff] %vm357, %v354
  %372 = vst.msk [vmem:[%s8 + $0x70] sm:$0xff] %vm357, %v355
  %373 = vst.msk [vmem:[%s8 + $0x78] sm:$0xff] %vm357, %v356
  %v374 = vld [vmem:[%s5] sm:$0xff]
  %v375 = vld [vmem:[%s5 + $0x8] sm:$0xff]
  %v376 = vld [vmem:[%s5 + $0x10] sm:$0xff]
  %v377 = vld [vmem:[%s5 + $0x18] sm:$0xff]
  %v378 = vld [vmem:[%s5 + $0x20] sm:$0xff]
  %v379 = vld [vmem:[%s5 + $0x28] sm:$0xff]
  %v380 = vld [vmem:[%s5 + $0x30] sm:$0xff]
  %v381 = vld [vmem:[%s5 + $0x38] sm:$0xff]
  %v382 = vld [vmem:[%s5 + $0x40] sm:$0xff]
  %v383 = vld [vmem:[%s5 + $0x48] sm:$0xff]
  %v384 = vld [vmem:[%s5 + $0x50] sm:$0xff]
  %v385 = vld [vmem:[%s5 + $0x58] sm:$0xff]
  %v386 = vld [vmem:[%s5 + $0x60] sm:$0xff]
  %v387 = vld [vmem:[%s5 + $0x68] sm:$0xff]
  %v388 = vld [vmem:[%s5 + $0x70] sm:$0xff]
  %v389 = vld [vmem:[%s5 + $0x78] sm:$0xff]
  %v390 = vld [vmem:[%s6] sm:$0xff]
  %v391 = vld [vmem:[%s6 + $0x8] sm:$0xff]
  %v392 = vld [vmem:[%s6 + $0x10] sm:$0xff]
  %v393 = vld [vmem:[%s6 + $0x18] sm:$0xff]
  %v394 = vld [vmem:[%s6 + $0x20] sm:$0xff]
  %v395 = vld [vmem:[%s6 + $0x28] sm:$0xff]
  %v396 = vld [vmem:[%s6 + $0x30] sm:$0xff]
  %v397 = vld [vmem:[%s6 + $0x38] sm:$0xff]
  %v398 = vld [vmem:[%s6 + $0x40] sm:$0xff]
  %v399 = vld [vmem:[%s6 + $0x48] sm:$0xff]
  %v400 = vld [vmem:[%s6 + $0x50] sm:$0xff]
  %v401 = vld [vmem:[%s6 + $0x58] sm:$0xff]
  %v402 = vld [vmem:[%s6 + $0x60] sm:$0xff]
  %v403 = vld [vmem:[%s6 + $0x68] sm:$0xff]
  %v404 = vld [vmem:[%s6 + $0x70] sm:$0xff]
  %v405 = vld [vmem:[%s6 + $0x78] sm:$0xff]
  %v406 = vld [vmem:[%s7] sm:$0xff]
  %v407 = vld [vmem:[%s7 + $0x8] sm:$0xff]
  %v408 = vld [vmem:[%s7 + $0x10] sm:$0xff]
  %v409 = vld [vmem:[%s7 + $0x18] sm:$0xff]
  %v410 = vld [vmem:[%s7 + $0x20] sm:$0xff]
  %v411 = vld [vmem:[%s7 + $0x28] sm:$0xff]
  %v412 = vld [vmem:[%s7 + $0x30] sm:$0xff]
  %v413 = vld [vmem:[%s7 + $0x38] sm:$0xff]
  %v414 = vld [vmem:[%s7 + $0x40] sm:$0xff]
  %v415 = vld [vmem:[%s7 + $0x48] sm:$0xff]
  %v416 = vld [vmem:[%s7 + $0x50] sm:$0xff]
  %v417 = vld [vmem:[%s7 + $0x58] sm:$0xff]
  %v418 = vld [vmem:[%s7 + $0x60] sm:$0xff]
  %v419 = vld [vmem:[%s7 + $0x68] sm:$0xff]
  %v420 = vld [vmem:[%s7 + $0x70] sm:$0xff]
  %v421 = vld [vmem:[%s7 + $0x78] sm:$0xff]
  %v422 = vsub.f32 %v341, %v374
  %v423 = vsub.f32 %v342, %v375
  %v424 = vsub.f32 %v343, %v376
  %v425 = vsub.f32 %v344, %v377
  %v426 = vsub.f32 %v345, %v378
  %v427 = vsub.f32 %v346, %v379
  %v428 = vsub.f32 %v347, %v380
  %v429 = vsub.f32 %v348, %v381
  %v430 = vsub.f32 %v349, %v382
  %v431 = vsub.f32 %v350, %v383
  %v432 = vsub.f32 %v351, %v384
  %v433 = vsub.f32 %v352, %v385
  %v434 = vsub.f32 %v353, %v386
  %v435 = vsub.f32 %v354, %v387
  %v436 = vsub.f32 %v355, %v388
  %v437 = vsub.f32 %v356, %v389
  %vm438 = vcmp.gt.f32.partialorder %v390, 0.5
  %vm439 = vcmp.gt.f32.partialorder %v391, 0.5
  %vm440 = vcmp.gt.f32.partialorder %v392, 0.5
  %vm441 = vcmp.gt.f32.partialorder %v393, 0.5
  %vm442 = vcmp.gt.f32.partialorder %v394, 0.5
  %vm443 = vcmp.gt.f32.partialorder %v395, 0.5
  %vm444 = vcmp.gt.f32.partialorder %v396, 0.5
  %vm445 = vcmp.gt.f32.partialorder %v397, 0.5
  %vm446 = vcmp.gt.f32.partialorder %v398, 0.5
  %vm447 = vcmp.gt.f32.partialorder %v399, 0.5
  %vm448 = vcmp.gt.f32.partialorder %v400, 0.5
  %vm449 = vcmp.gt.f32.partialorder %v401, 0.5
  %vm450 = vcmp.gt.f32.partialorder %v402, 0.5
  %vm451 = vcmp.gt.f32.partialorder %v403, 0.5
  %vm452 = vcmp.gt.f32.partialorder %v404, 0.5
  %vm453 = vcmp.gt.f32.partialorder %v405, 0.5
  %v454 = vmul.f32 %v422, %v422
  %v455 = vmul.f32 %v423, %v423
  %v456 = vmul.f32 %v424, %v424
  %v457 = vmul.f32 %v425, %v425
  %v458 = vmul.f32 %v426, %v426
  %v459 = vmul.f32 %v427, %v427
  %v460 = vmul.f32 %v428, %v428
  %v461 = vmul.f32 %v429, %v429
  %v462 = vmul.f32 %v430, %v430
  %v463 = vmul.f32 %v431, %v431
  %v464 = vmul.f32 %v432, %v432
  %v465 = vmul.f32 %v433, %v433
  %v466 = vmul.f32 %v434, %v434
  %v467 = vmul.f32 %v435, %v435
  %v468 = vmul.f32 %v436, %v436
  %v469 = vmul.f32 %v437, %v437
  %v470 = vsub.f32 0.0, %v422
  %v471 = vsub.f32 0.0, %v423
  %v472 = vsub.f32 0.0, %v424
  %v473 = vsub.f32 0.0, %v425
  %v474 = vsub.f32 0.0, %v426
  %v475 = vsub.f32 0.0, %v427
  %v476 = vsub.f32 0.0, %v428
  %v477 = vsub.f32 0.0, %v429
  %v478 = vsub.f32 0.0, %v430
  %v479 = vsub.f32 0.0, %v431
  %v480 = vsub.f32 0.0, %v432
  %v481 = vsub.f32 0.0, %v433
  %v482 = vsub.f32 0.0, %v434
  %v483 = vsub.f32 0.0, %v435
  %v484 = vsub.f32 0.0, %v436
  %v485 = vsub.f32 0.0, %v437
  %v486 = vmax.f32 %v470, 0.0
  %v487 = vmax.f32 %v471, 0.0
  %v488 = vmax.f32 %v472, 0.0
  %v489 = vmax.f32 %v473, 0.0
  %v490 = vmax.f32 %v474, 0.0
  %v491 = vmax.f32 %v475, 0.0
  %v492 = vmax.f32 %v476, 0.0
  %v493 = vmax.f32 %v477, 0.0
  %v494 = vmax.f32 %v478, 0.0
  %v495 = vmax.f32 %v479, 0.0
  %v496 = vmax.f32 %v480, 0.0
  %v497 = vmax.f32 %v481, 0.0
  %v498 = vmax.f32 %v482, 0.0
  %v499 = vmax.f32 %v483, 0.0
  %v500 = vmax.f32 %v484, 0.0
  %v501 = vmax.f32 %v485, 0.0
  %v502 = vmul.f32 %v486, %v486
  %v503 = vmul.f32 %v487, %v487
  %v504 = vmul.f32 %v488, %v488
  %v505 = vmul.f32 %v489, %v489
  %v506 = vmul.f32 %v490, %v490
  %v507 = vmul.f32 %v491, %v491
  %v508 = vmul.f32 %v492, %v492
  %v509 = vmul.f32 %v493, %v493
  %v510 = vmul.f32 %v494, %v494
  %v511 = vmul.f32 %v495, %v495
  %v512 = vmul.f32 %v496, %v496
  %v513 = vmul.f32 %v497, %v497
  %v514 = vmul.f32 %v498, %v498
  %v515 = vmul.f32 %v499, %v499
  %v516 = vmul.f32 %v500, %v500
  %v517 = vmul.f32 %v501, %v501
  %v518 = vsel %vm438, %v454, %v502
  %v519 = vsel %vm439, %v455, %v503
  %v520 = vsel %vm440, %v456, %v504
  %v521 = vsel %vm441, %v457, %v505
  %v522 = vsel %vm442, %v458, %v506
  %v523 = vsel %vm443, %v459, %v507
  %v524 = vsel %vm444, %v460, %v508
  %v525 = vsel %vm445, %v461, %v509
  %v526 = vsel %vm446, %v462, %v510
  %v527 = vsel %vm447, %v463, %v511
  %v528 = vsel %vm448, %v464, %v512
  %v529 = vsel %vm449, %v465, %v513
  %v530 = vsel %vm450, %v466, %v514
  %v531 = vsel %vm451, %v467, %v515
  %v532 = vsel %vm452, %v468, %v516
  %v533 = vsel %vm453, %v469, %v517
  %vm534 = vcmp.gt.f32.partialorder %v406, 0.5
  %vm535 = vcmp.gt.f32.partialorder %v407, 0.5
  %vm536 = vcmp.gt.f32.partialorder %v408, 0.5
  %vm537 = vcmp.gt.f32.partialorder %v409, 0.5
  %vm538 = vcmp.gt.f32.partialorder %v410, 0.5
  %vm539 = vcmp.gt.f32.partialorder %v411, 0.5
  %vm540 = vcmp.gt.f32.partialorder %v412, 0.5
  %vm541 = vcmp.gt.f32.partialorder %v413, 0.5
  %vm542 = vcmp.gt.f32.partialorder %v414, 0.5
  %vm543 = vcmp.gt.f32.partialorder %v415, 0.5
  %vm544 = vcmp.gt.f32.partialorder %v416, 0.5
  %vm545 = vcmp.gt.f32.partialorder %v417, 0.5
  %vm546 = vcmp.gt.f32.partialorder %v418, 0.5
  %vm547 = vcmp.gt.f32.partialorder %v419, 0.5
  %vm548 = vcmp.gt.f32.partialorder %v420, 0.5
  %vm549 = vcmp.gt.f32.partialorder %v421, 0.5
  %v550 = vsel %vm534, %v518, 0.0
  %v551 = vsel %vm535, %v519, 0.0
  %v552 = vsel %vm536, %v520, 0.0
  %v553 = vsel %vm537, %v521, 0.0
  %v554 = vsel %vm538, %v522, 0.0
  %v555 = vsel %vm539, %v523, 0.0
  %v556 = vsel %vm540, %v524, 0.0
  %v557 = vsel %vm541, %v525, 0.0
  %v558 = vsel %vm542, %v526, 0.0
  %v559 = vsel %vm543, %v527, 0.0
  %v560 = vsel %vm544, %v528, 0.0
  %v561 = vsel %vm545, %v529, 0.0
  %v562 = vsel %vm546, %v530, 0.0
  %v563 = vsel %vm547, %v531, 0.0
  %v564 = vsel %vm548, %v532, 0.0
  %v565 = vsel %vm549, %v533, 0.0
  %566 = vst.msk [vmem:[%s9] sm:$0xff] %vm357, %v550
  %567 = vst.msk [vmem:[%s9 + $0x8] sm:$0xff] %vm357, %v551
  %568 = vst.msk [vmem:[%s9 + $0x10] sm:$0xff] %vm357, %v552
  %569 = vst.msk [vmem:[%s9 + $0x18] sm:$0xff] %vm357, %v553
  %570 = vst.msk [vmem:[%s9 + $0x20] sm:$0xff] %vm357, %v554
  %571 = vst.msk [vmem:[%s9 + $0x28] sm:$0xff] %vm357, %v555
  %572 = vst.msk [vmem:[%s9 + $0x30] sm:$0xff] %vm357, %v556
  %573 = vst.msk [vmem:[%s9 + $0x38] sm:$0xff] %vm357, %v557
  %574 = vst.msk [vmem:[%s9 + $0x40] sm:$0xff] %vm357, %v558
  %575 = vst.msk [vmem:[%s9 + $0x48] sm:$0xff] %vm357, %v559
  %576 = vst.msk [vmem:[%s9 + $0x50] sm:$0xff] %vm357, %v560
  %577 = vst.msk [vmem:[%s9 + $0x58] sm:$0xff] %vm357, %v561
  %578 = vst.msk [vmem:[%s9 + $0x60] sm:$0xff] %vm357, %v562
  %579 = vst.msk [vmem:[%s9 + $0x68] sm:$0xff] %vm357, %v563
  %580 = vst.msk [vmem:[%s9 + $0x70] sm:$0xff] %vm357, %v564
  %581 = vst.msk [vmem:[%s9 + $0x78] sm:$0xff] %vm357, %v565
  // Predicated region
  $region34: #{tpu_custom_call.1} parent=0 // pred_check
    _
  $region35: #{tpu_custom_call.1} parent=0 // pred_check_branch
    %583 = sbr.rel (0) target = $region37
  $region36: #{tpu_custom_call.1} parent=0 // pred_region
    _
  $region37: #{tpu_custom_call.1} parent=0 // pred_fallthru
    _
  // Predicated region
  $region38: #{tpu_custom_call.1} parent=0 // pred_check
    _
  $region39: #{tpu_custom_call.1} parent=0 // pred_check_branch
    %585 = sbr.rel (0) target = $region41
  $region40: #{tpu_custom_call.1} parent=0 // pred_region
    _
  $region41: #{tpu_custom_call.1} parent=0 // pred_fallthru
    _
  // Predicated region
  $region42: #{tpu_custom_call.1} parent=0 // pred_check
    _
  $region43: #{tpu_custom_call.1} parent=0 // pred_check_branch
    %587 = sbr.rel (0) target = $region45
  $region44: #{tpu_custom_call.1} parent=0 // pred_region
    _
  $region45: #{tpu_custom_call.1} parent=0 // pred_fallthru
    _
  // Predicated region
  $region46: #{tpu_custom_call.1} parent=0 // pred_check
    _
  $region47: #{tpu_custom_call.1} parent=0 // pred_check_branch
    %589 = sbr.rel (0) target = $region49
  $region48: #{tpu_custom_call.1} parent=0 // pred_region
    _
  $region49: #{tpu_custom_call.1} parent=0 // pred_fallthru
    _

</llo_original>
